<compile_context>
chip_gen: v6e
topology: v6e:2x2x1
jax: 0.10.0
libtpu: 0.0.40
codegen_flags: <defaults>
</compile_context>

<pallas_src>
import functools

import jax
import jax.numpy as jnp
from jax.experimental import pallas as pl
from jax.experimental.pallas import tpu as pltpu


def adain_kernel(x_ref, ystat_ref, o_ref, *, eps, hw, mask_lanes):
    # x_ref    : (row_tile, hw)  activation rows, storage dtype (f32/bf16)
    # ystat_ref: (row_tile, 2)   f32 columns: [y_mean, y_std]
    # o_ref    : (row_tile, hw)  output, same dtype as x
    x = x_ref[...].astype(jnp.float32)              # per-tile upcast; math in f32
    y_mean = ystat_ref[:, 0:1]                      # (row_tile, 1)
    y_std = ystat_ref[:, 1:2]                       # (row_tile, 1)

    if mask_lanes:
        # hw not lane-aligned: physical pad lanes are not guaranteed zero, so
        # mask them out of the reductions (cheap VPU work, hidden under DMA).
        lane = jax.lax.broadcasted_iota(jnp.int32, x.shape, 1)
        xr = jnp.where(lane < hw, x, 0.0)
    else:
        xr = x

    # One-pass per-row statistics.
    s = jnp.sum(xr, axis=-1, keepdims=True)         # (row_tile, 1)
    ss = jnp.sum(xr * xr, axis=-1, keepdims=True)   # (row_tile, 1)
    x_mean = s * (1.0 / hw)
    # unbiased variance (ddof=1) = (ss - hw*mean^2) / (hw - 1); clamp cancellation.
    x_var = jnp.maximum(ss - x_mean * s, 0.0) * (1.0 / (hw - 1))

    inv_std = jax.lax.rsqrt(x_var + eps)            # EUP rsqrt, essentially free
    scale = y_std * inv_std                         # (row_tile, 1)
    shift = y_mean - x_mean * scale                 # (row_tile, 1)

    # out = (x - x_mean) / x_std * y_std + y_mean  ==  x * scale + shift
    o_ref[...] = (x * scale + shift).astype(o_ref.dtype)


def _pick_row_tile(n_rows, hw, itemsize, sublane, budget_bytes=6 << 20):
    """Largest sublane-aligned row tile whose (row_tile, hw) block fits the
    per-block budget.  Prefers an exact divisor of n_rows (no ragged edge
    block); if the whole array fits, use it (full-dim blocks are always legal)."""
    bytes_per_row = hw * itemsize
    max_rows = (budget_bytes // max(bytes_per_row, 1)) // sublane * sublane
    max_rows = max(max_rows, sublane)
    if n_rows <= max_rows:
        return n_rows
    for t in range(max_rows, sublane - 1, -sublane):
        if n_rows % t == 0:
            return t
    # Ragged edge: Pallas masks the partial writeback; rows are independent.
    return max_rows


def adain_forward(x, y, w, b, eps=1e-5):
    """x: (bs, ch, H, W), y: (bs, num_classes),
       w: (4*ch, num_classes) Linear weight, b: (4*ch,) Linear bias."""
    bs, ch, H, W = x.shape
    hw = H * W
    n_rows = bs * ch

    # --- y path hoisted out of the kernel (tiny, MXU-degenerate work) -------
    y_lin = (y.astype(jnp.float32) @ w.T.astype(jnp.float32)
             + b.astype(jnp.float32)).reshape(n_rows, 4)
    y_mean = jnp.mean(y_lin, axis=-1, keepdims=True)                       # (n_rows, 1)
    y_var = jnp.sum((y_lin - y_mean) ** 2, axis=-1, keepdims=True) / 3.0   # ddof=1
    y_std = jnp.sqrt(y_var + eps)                                          # (n_rows, 1)
    y_stat = jnp.concatenate([y_mean, y_std], axis=-1)                     # (n_rows, 2) f32

    # --- x stays in its storage dtype, no pad / astype copies ---------------
    x2 = x.reshape(n_rows, hw)

    itemsize = jnp.dtype(x.dtype).itemsize
    sublane = 8 if itemsize >= 4 else (16 if itemsize == 2 else 32)
    row_tile = _pick_row_tile(n_rows, hw, itemsize, sublane)
    grid = (pl.cdiv(n_rows, row_tile),)

    kernel = functools.partial(adain_kernel, eps=float(eps), hw=hw,
                               mask_lanes=(hw % 128 != 0))

    out2 = pl.pallas_call(
        kernel,
        out_shape=jax.ShapeDtypeStruct((n_rows, hw), x.dtype),
        grid_spec=pltpu.PrefetchScalarGridSpec(
            num_scalar_prefetch=0,
            grid=grid,
            in_specs=[
                pl.BlockSpec((row_tile, hw), lambda i: (i, 0)),
                pl.BlockSpec((row_tile, 2), lambda i: (i, 0)),
            ],
            out_specs=pl.BlockSpec((row_tile, hw), lambda i: (i, 0)),
        ),
        compiler_params=pltpu.CompilerParams(
            dimension_semantics=("parallel",),
            vmem_limit_bytes=40 << 20),
    )(x2, y_stat)

    return out2.reshape(bs, ch, H, W)


def adain_ref(x, y, w, b, eps=1e-5):
    """Plain-JAX reference matching the PyTorch forward (torch.var is unbiased)."""
    bs, ch = x.shape[:2]
    x_ = x.reshape(bs, ch, -1).astype(jnp.float32)
    y_ = (y @ w.T + b).reshape(bs, ch, -1).astype(jnp.float32)
    x_std = jnp.sqrt(jnp.var(x_, axis=-1, ddof=1) + eps)[..., None, None]
    x_mean = jnp.mean(x_, axis=-1)[..., None, None]
    y_std = jnp.sqrt(jnp.var(y_, axis=-1, ddof=1) + eps)[..., None, None]
    y_mean = jnp.mean(y_, axis=-1)[..., None, None]
    out = (x.astype(jnp.float32) - x_mean) / x_std * y_std + y_mean
    return out.astype(x.dtype)


if __name__ == "__main__":
    bs, ch, H, W = 2, 4, 16, 16
    num_classes = 8
    eps = 1e-5

    key = jax.random.PRNGKey(0)
    kx, ky, kw, kb = jax.random.split(key, 4)
    x = jax.random.normal(kx, (bs, ch, H, W), dtype=jnp.float32)
    y = jax.random.normal(ky, (bs, num_classes), dtype=jnp.float32)
    # nn.Linear(num_classes, 4*ch): weight (4*ch, num_classes), bias (4*ch,)
    w = jax.random.normal(kw, (4 * ch, num_classes), dtype=jnp.float32) * 0.1
    b = jax.random.normal(kb, (4 * ch,), dtype=jnp.float32) * 0.1

    out = adain_forward(x, y, w, b, eps=eps)
    out = jax.block_until_ready(out)

    expected = adain_ref(x, y, w, b, eps=eps)
    assert out.shape == (bs, ch, H, W)
    assert out.dtype == x.dtype
    assert jnp.allclose(out, expected, rtol=1e-4, atol=1e-4), (
        float(jnp.max(jnp.abs(out - expected)))
    )
    print("KERNEL_OK")
</pallas_src>

<mosaic_0001>
module attributes {stable_mosaic.version = 11 : i64} {
  func.func @adain_kernel(%arg0: i32, %arg1: memref<8x256xf32, #tpu.memory_space<vmem>>, %arg2: memref<8x2xf32, #tpu.memory_space<vmem>>, %arg3: memref<8x256xf32, #tpu.memory_space<vmem>>) attributes {dimension_semantics = [#tpu.dimension_semantics<parallel>], iteration_bounds = array<i64: 1>, scalar_prefetch = 0 : i64, scratch_operands = 0 : i64, tpu.core_type = #tpu.core_type<tc>, window_params = [{transform_indices = @transform_0, window_bounds = array<i64: 8, 256>}, {transform_indices = @transform_1, window_bounds = array<i64: 8, 2>}, {transform_indices = @transform_2, window_bounds = array<i64: 8, 256>}]} {
    %c0 = arith.constant 0 : index
    %c0_0 = arith.constant 0 : index
    %0 = vector.load %arg1[%c0, %c0_0] : memref<8x256xf32, #tpu.memory_space<vmem>>, vector<8x256xf32>
    %c0_1 = arith.constant 0 : index
    %c0_2 = arith.constant 0 : index
    %1 = vector.load %arg2[%c0_1, %c0_2] : memref<8x2xf32, #tpu.memory_space<vmem>>, vector<8x1xf32>
    %c0_3 = arith.constant 0 : index
    %c1 = arith.constant 1 : index
    %2 = vector.load %arg2[%c0_3, %c1] : memref<8x2xf32, #tpu.memory_space<vmem>>, vector<8x1xf32>
    %cst = arith.constant dense<0.000000e+00> : vector<8xf32>
    %3 = vector.multi_reduction <add>, %0, %cst [1] : vector<8x256xf32> to vector<8xf32>
    %4 = vector.shape_cast %3 : vector<8xf32> to vector<8x1xf32>
    %5 = arith.mulf %0, %0 : vector<8x256xf32>
    %cst_4 = arith.constant dense<0.000000e+00> : vector<8xf32>
    %6 = vector.multi_reduction <add>, %5, %cst_4 [1] : vector<8x256xf32> to vector<8xf32>
    %7 = vector.shape_cast %6 : vector<8xf32> to vector<8x1xf32>
    %cst_5 = arith.constant 3.906250e-03 : f32
    %8 = vector.broadcast %cst_5 : f32 to vector<8x1xf32>
    %9 = arith.mulf %4, %8 : vector<8x1xf32>
    %10 = arith.mulf %9, %4 : vector<8x1xf32>
    %11 = arith.subf %7, %10 : vector<8x1xf32>
    %cst_6 = arith.constant 0.000000e+00 : f32
    %12 = vector.broadcast %cst_6 : f32 to vector<8x1xf32>
    %13 = arith.maximumf %11, %12 : vector<8x1xf32>
    %cst_7 = arith.constant 0.00392156886 : f32
    %14 = vector.broadcast %cst_7 : f32 to vector<8x1xf32>
    %15 = arith.mulf %13, %14 : vector<8x1xf32>
    %cst_8 = arith.constant 9.99999974E-6 : f32
    %16 = vector.broadcast %cst_8 : f32 to vector<8x1xf32>
    %17 = arith.addf %15, %16 : vector<8x1xf32>
    %18 = math.rsqrt %17 : vector<8x1xf32>
    %19 = arith.mulf %2, %18 : vector<8x1xf32>
    %20 = arith.mulf %9, %19 : vector<8x1xf32>
    %21 = arith.subf %1, %20 : vector<8x1xf32>
    %22 = vector.broadcast %19 : vector<8x1xf32> to vector<8x256xf32>
    %23 = arith.mulf %0, %22 : vector<8x256xf32>
    %24 = vector.broadcast %21 : vector<8x1xf32> to vector<8x256xf32>
    %25 = arith.addf %23, %24 : vector<8x256xf32>
    %c0_9 = arith.constant 0 : index
    %c0_10 = arith.constant 0 : index
    %26 = vector.load %arg3[%c0_9, %c0_10] : memref<8x256xf32, #tpu.memory_space<vmem>>, vector<8x256xf32>
    tpu.vector_store %arg3[%c0_9, %c0_10], %25 {strides = array<i32>} : memref<8x256xf32, #tpu.memory_space<vmem>>, vector<8x256xf32>,
    return
  }
  func.func @transform_0(%arg0: i32) -> (i32, i32) {
    %c0_i32 = arith.constant 0 : i32
    %c0_i32_0 = arith.constant 0 : i32
    return %arg0, %c0_i32 : i32, i32
  }
  func.func @transform_1(%arg0: i32) -> (i32, i32) {
    %c0_i32 = arith.constant 0 : i32
    %c0_i32_0 = arith.constant 0 : i32
    return %arg0, %c0_i32 : i32, i32
  }
  func.func @transform_2(%arg0: i32) -> (i32, i32) {
    %c0_i32 = arith.constant 0 : i32
    %c0_i32_0 = arith.constant 0 : i32
    return %arg0, %c0_i32 : i32, i32
  }
}

</mosaic_0001>

<llo_original>
// kernel: tpu_custom_call.1
$region0: #{tpu_custom_call.1}
  #allocation0 [shape = 'u32[]', space=smem, size = 0x4, offset = 0x4, fixed_abs, tag = 'smem constant byte address 0x4 - core index']
  #allocation1 [shape = 'u32[144,128]{1,0:T(1,128)}', space=vmem, size = 0x12000, scoped, tag = 'internal scratch']
  %s0 = inlined_call_operand.hbm [shape: f32[8,256], index: 0, kind: input, shape index: {}]
  %s1 = inlined_call_operand.vmem [shape: f32[8,2], index: 1, kind: input, shape index: {}]
  %s2 = inlined_call_operand.hbm [shape: f32[8,256], index: 2, kind: output, shape index: {}]
  %s3 = sld [smem:[#allocation0]]
  $region22: #{tpu_custom_call.1} parent=0
    _
  %s5 = ssub.s32 1, %s3
  %s6 = scalar_select 0, %s5, %s3
  $region1: #{tpu_custom_call.1} parent=0
    #allocation2 [shape = 'u8[8192]{0}', space=vmem, size = 0x2000, scoped, tag = 'input window, operand 0, single buffered']
    #allocation3 [shape = 's32[1]{0}', space=sflag, size = 0x4, scoped, tag = 'scoped memory for tpu_custom_call.1']
    #allocation4 [shape = 's32[1]{0}', space=sflag, size = 0x4, scoped, tag = 'scoped memory for tpu_custom_call.1']
    #allocation5 [shape = 'u8[8192]{0}', space=vmem, size = 0x2000, scoped, tag = 'output window, operand 0, single buffered']
    %7 = vsyncpa [#allocation3], 0
    %8 = vsyncpa [#allocation4], 0
    // Predicated region
    $region2: #{tpu_custom_call.1} parent=1 // pred_check
      _
    $region3: #{tpu_custom_call.1} parent=1 // pred_check_branch
      %10 = sbr.rel (0) target = $region5
    $region4: #{tpu_custom_call.1} parent=1 // pred_region
      %s12 = ssub.s32 256, 256
      %13 = vsyncadd [#allocation3], %s12
      %s15 = sshll.u32 [#allocation2], 4
      %s16 = int_to_ptr.vmem [resolvable:$true] %s15
      %18 = dma.hbm_to_vmem [thread:$0]  %s0, 256, %s16, [#allocation3]
    $region5: #{tpu_custom_call.1} parent=1 // pred_fallthru
      _
    // Predicated region
    $region6: #{tpu_custom_call.1} parent=1 // pred_check
      _
    $region7: #{tpu_custom_call.1} parent=1 // pred_check_branch
      %20 = sbr.rel (0) target = $region9
    $region8: #{tpu_custom_call.1} parent=1 // pred_region
      _
    $region9: #{tpu_custom_call.1} parent=1 // pred_fallthru
      _
    // Predicated region
    $region10: #{tpu_custom_call.1} parent=1 // pred_check
      _
    $region11: #{tpu_custom_call.1} parent=1 // pred_check_branch
      %22 = sbr.rel (0) target = $region13
    $region12: #{tpu_custom_call.1} parent=1 // pred_region
      %23 = dma.done [#allocation3], 256
    $region13: #{tpu_custom_call.1} parent=1 // pred_fallthru
      _
    %v24 = vld [vmem:[#allocation2] sm:$0xff]
    %v25 = vld [vmem:[#allocation2 + $0x8] sm:$0xff]
    %v26 = vld [vmem:[%s1] sm:$0xff]
    %v27 = vadd.f32 %v24, %v25
    %28 = vadd.xlane.f32.xlu0 %v27
    %v29 = vpop.xlane.xlu0 %28
    %v30 = vmul.f32 %v24, %v24
    %v31 = vmul.f32 %v25, %v25
    %v32 = vadd.f32 %v30, %v31
    %33 = vadd.xlane.f32.xlu0 %v32
    %v34 = vpop.xlane.xlu0 %33
    %v35 = vmul.f32 %v29, 0.00390625
    %v36 = vmul.f32 %v35, %v29
    %v37 = vsub.f32 %v34, %v36
    %v38 = vmax.f32 %v37, 0.0
    %v39 = vmul.f32 %v38, 0.003921569
    %v40 = vadd.f32 %v39, 1e-05
    %v41 = vrsqrt.pop %v40
    %v42 = vmul.f32 %v26, %v41
    %v43 = vmul.f32 %v35, %v42
    %45 = vrot.lane.b32.xlu0 %v43, 127
    %v46 = vpop.permute.xlu0 %45
    %v48 = vsub.f32 %v26, %v46
    %50 = vset.pattern.permute.xlu0 1
    %51 = vperm.xlu0 %50, %v42
    %v52 = vpop.permute.xlu0 %51
    %v54 = vmul.f32 %v24, %v52
    %v55 = vmul.f32 %v25, %v52
    %57 = vset.pattern.permute.xlu0 0
    %58 = vperm.xlu0 %57, %v48
    %v59 = vpop.permute.xlu0 %58
    %v61 = vadd.f32 %v54, %v59
    %v62 = vadd.f32 %v55, %v59
    %63 = vst [vmem:[#allocation5] sm:$0xff] %v61
    %64 = vst [vmem:[#allocation5 + $0x8] sm:$0xff] %v62
    // Predicated region
    $region14: #{tpu_custom_call.1} parent=1 // pred_check
      _
    $region15: #{tpu_custom_call.1} parent=1 // pred_check_branch
      %66 = sbr.rel (0) target = $region17
    $region16: #{tpu_custom_call.1} parent=1 // pred_region
      %s68 = ssub.s32 256, 256
      %69 = vsyncadd [#allocation4], %s68
      %s71 = sshll.u32 [#allocation5], 4
      %s72 = int_to_ptr.vmem [resolvable:$true] %s71
      %74 = dma.vmem_to_hbm [thread:$0]  %s72, 256, %s2, [#allocation4]
    $region17: #{tpu_custom_call.1} parent=1 // pred_fallthru
      _
    // Predicated region
    $region18: #{tpu_custom_call.1} parent=1 // pred_check
      _
    $region19: #{tpu_custom_call.1} parent=1 // pred_check_branch
      %76 = sbr.rel (0) target = $region21
    $region20: #{tpu_custom_call.1} parent=1 // pred_region
      %77 = dma.done [#allocation4], 256
    $region21: #{tpu_custom_call.1} parent=1 // pred_fallthru
      _
    %78 = vsyncpa [#allocation3], 1
    %79 = vsyncpa [#allocation4], 1

</llo_original>
